<compile_context>
chip_gen: v5e
topology: v5e:2x2
jax: 0.10.0
libtpu: 0.0.40
codegen_flags: <defaults>
</compile_context>

<pallas_src>
import numpy as np

import jax
import jax.numpy as jnp
from jax import lax
from jax.experimental import pallas as pl
from jax.experimental.pallas import tpu as pltpu

_LANE = 128


def _ceil_to(x, m):
    return ((x + m - 1) // m) * m


# ----------------------------------------------------------------------------
# Wrapper-side (trace-time) weight re-layout helpers
# ----------------------------------------------------------------------------
def _banded_conv_weights(w_oihw, h_in, w_in):
    """Per-kernel-row banded (Toeplitz) weight matrices.

    Returns t of shape (KH, W*Cin, OW*Cout) such that, for an image laid out as
    rows = h and lanes = w*Cin + cin, the valid cross-correlation output
    (rows = oh, lanes = ow*Cout + cout) is   sum_i  A[i:i+OH, :] @ t[i].
    Matches PyTorch Conv2d (OIHW weights, valid padding, stride 1).
    """
    cout, cin, kh, kw = w_oihw.shape
    oh, ow = h_in - kh + 1, w_in - kw + 1

    i_idx = np.arange(kh, dtype=np.int32)[:, None, None]            # (KH,1,1)
    r_idx = np.arange(w_in * cin, dtype=np.int32)[None, :, None]    # (1,W*Cin,1)
    c_idx = np.arange(ow * cout, dtype=np.int32)[None, None, :]     # (1,1,OW*Cout)

    w_pos, ci = r_idx // cin, r_idx % cin
    ow_pos, co = c_idx // cout, c_idx % cout
    j_idx = w_pos - ow_pos
    valid = (j_idx >= 0) & (j_idx < kw)
    j_safe = np.clip(j_idx, 0, kw - 1)

    flat_idx = ((co * cin + ci) * kh + i_idx) * kw + j_safe          # (KH,W*Cin,OW*Cout)
    w_flat = w_oihw.astype(jnp.float32).reshape(-1)
    t = jnp.where(valid, w_flat[flat_idx], 0.0)
    return t, oh, ow


# ----------------------------------------------------------------------------
# Fused Pallas kernel: conv1+ReLU -> conv2+ReLU -> flatten -> linear -> softmax(dim=0)
# ----------------------------------------------------------------------------
def _fused_classifier_kernel(x_ref, t1_ref, b1_ref, t2_ref, b2_ref,
                             wl_ref, bl_ref, o_ref, y1_s, y2_s, y2f_s):
    n_img = o_ref.shape[0]              # batch (rows of the final softmax)
    kh2 = t2_ref.shape[0]               # conv2 kernel height
    m2 = y2_s.shape[0]                  # N * OH2 (conv2 output rows, h-major)
    oh2 = m2 // n_img
    l2 = y2_s.shape[1]                  # conv2 lane width (padded to 128)

    # ---- Conv1 + ReLU: ONE dot (N*OH1, KH1*W*Cin) @ (KH1*W*Cin, 128).
    #      Rows are ordered (oh1 * N + n); lanes padded to 128 (zero weights/bias).
    v1 = jnp.dot(x_ref[...], t1_ref[...], preferred_element_type=jnp.float32)
    y1_s[...] = jnp.maximum(v1 + b1_ref[...], 0.0)

    # ---- Conv2 + ReLU: KH2 dots, both images stacked along M (M = N*OH2 = 20).
    #      Because rows are h-major interleaved, the LHS for kernel-row i is the
    #      contiguous sublane slice y1_s[N*i : N*i + M, :].
    acc2 = jnp.dot(y1_s[0:m2, :], t2_ref[0], preferred_element_type=jnp.float32)
    for i in range(1, kh2):                                   # static unroll (3 adds)
        acc2 = acc2 + jnp.dot(y1_s[n_img * i:n_img * i + m2, :], t2_ref[i],
                              preferred_element_type=jnp.float32)
    y2_s[...] = jnp.maximum(acc2 + b2_ref[...], 0.0)          # (N*OH2, 128), lane-dense

    # ---- Flatten: move the oh2 axis into lanes -> lane-dense (N, OH2*128) slab.
    #      10 contiguous (N,128) copies; destination lane offsets are 128-aligned.
    for hh in range(oh2):
        y2f_s[:, hh * l2:(hh + 1) * l2] = y2_s[n_img * hh:n_img * (hh + 1), :]

    # ---- Linear: ONE (N, OH2*128) @ (OH2*128, 128) dot; logits kept in vregs.
    logits = jnp.dot(y2f_s[...], wl_ref[...],
                     preferred_element_type=jnp.float32) + bl_ref[...]

    # ---- Softmax over dim=0 (the batch axis), as in torch.nn.Softmax(dim=0).
    mx = jnp.max(logits, axis=0, keepdims=True)
    e = jnp.exp(logits - mx)
    s = jnp.sum(e, axis=0, keepdims=True)
    o_ref[...] = e * pl.reciprocal(s, approx=False)


# ----------------------------------------------------------------------------
# Forward pass wrapper
# ----------------------------------------------------------------------------
def image_classifier_forward(x_nchw, params):
    w1, b1, w2, b2, wl, bl = params
    n, c, h, w = x_nchw.shape
    c1, c2 = w1.shape[0], w2.shape[0]
    kh1, kh2 = w1.shape[2], w2.shape[2]
    n_cls = wl.shape[0]

    # Banded (Toeplitz) conv weights:  out = sum_i  rows[i:i+OH, :] @ t[i]
    t1, oh1, ow1 = _banded_conv_weights(w1, h, w)          # (KH1, W*Cin,   OW1*C1)
    t2, oh2, ow2 = _banded_conv_weights(w2, oh1, ow1)      # (KH2, OW1*C1,  OW2*C2)

    lane1 = _ceil_to(ow1 * c1, _LANE)                      # 91  -> 128
    lane2 = _ceil_to(ow2 * c2, _LANE)                      # 110 -> 128
    lane_cls = _ceil_to(n_cls, _LANE)                      # 13  -> 128

    # (N, H, W*C) row layout: lane index = w*C + cin.
    x_rows = jnp.transpose(x_nchw, (0, 2, 3, 1)).reshape(n, h, w * c).astype(jnp.float32)

    # ---- Conv1 operands: fold KH into K (im2row) and interleave rows h-major
    #      so row index = oh1 * N + n.
    x_im2row = jnp.concatenate([x_rows[:, i:i + oh1, :] for i in range(kh1)],
                               axis=-1)                                   # (N, OH1, KH1*W*C)
    x_cat = jnp.transpose(x_im2row, (1, 0, 2)).reshape(n * oh1, kh1 * w * c)

    t1_cat = jnp.pad(t1, ((0, 0), (0, 0), (0, lane1 - ow1 * c1)))
    t1_cat = t1_cat.reshape(kh1 * w * c, lane1)                           # (192, 128)
    b1_row = jnp.pad(jnp.tile(b1.astype(jnp.float32), ow1),
                     (0, lane1 - ow1 * c1)).reshape(1, lane1)

    # ---- Conv2 operands, zero-padded to 128 lanes on both K and output lanes.
    t2_pad = jnp.pad(t2, ((0, 0), (0, lane1 - ow1 * c1), (0, lane2 - ow2 * c2)))
    b2_row = jnp.pad(jnp.tile(b2.astype(jnp.float32), ow2),
                     (0, lane2 - ow2 * c2)).reshape(1, lane2)

    # ---- Linear weight: PyTorch flattens (C2, OH2, OW2); our y2 layout is
    #      (h, w*c) padded to 128 lanes and flattened h-major into K.
    wl_r = wl.astype(jnp.float32).reshape(n_cls, c2, oh2, ow2)            # (o, c, h, w)
    wl_r = jnp.transpose(wl_r, (2, 3, 1, 0)).reshape(oh2, ow2 * c2, n_cls)  # (h, w*c, o)
    wl_flat = jnp.pad(wl_r, ((0, 0), (0, lane2 - ow2 * c2), (0, lane_cls - n_cls)))
    wl_flat = wl_flat.reshape(oh2 * lane2, lane_cls)                      # (1280, 128)
    bl_row = jnp.pad(bl.astype(jnp.float32), (0, lane_cls - n_cls)).reshape(1, lane_cls)

    vmem = pl.BlockSpec(memory_space=pltpu.MemorySpace.VMEM)
    out = pl.pallas_call(
        _fused_classifier_kernel,
        out_shape=jax.ShapeDtypeStruct((n, lane_cls), jnp.float32),
        in_specs=[vmem] * 7,
        out_specs=vmem,
        scratch_shapes=[
            pltpu.VMEM((n * oh1, lane1), jnp.float32),     # y1: conv1 activations
            pltpu.VMEM((n * oh2, lane2), jnp.float32),     # y2: conv2 activations
            pltpu.VMEM((n, oh2 * lane2), jnp.float32),     # y2 flattened (Linear LHS)
        ],
    )(x_cat, t1_cat, b1_row, t2_pad, b2_row, wl_flat, bl_row)

    # Padded class lanes carry zero weight/bias; slice them off (never reduced over).
    return out[:, :n_cls]


# ----------------------------------------------------------------------------
# Pure-JAX reference for a correctness sanity check.
# ----------------------------------------------------------------------------
def _reference_forward(x_nchw, params):
    w1, b1, w2, b2, wl, bl = params
    dn = ("NCHW", "OIHW", "NCHW")
    y = lax.conv_general_dilated(x_nchw, w1, (1, 1), "VALID", dimension_numbers=dn)
    y = jnp.maximum(y + b1[None, :, None, None], 0.0)
    y = lax.conv_general_dilated(y, w2, (1, 1), "VALID", dimension_numbers=dn)
    y = jnp.maximum(y + b2[None, :, None, None], 0.0)
    flat = y.reshape(y.shape[0], -1)
    logits = flat @ wl.T + bl[None, :]
    return jax.nn.softmax(logits, axis=0)


# ----------------------------------------------------------------------------
# Main
# ----------------------------------------------------------------------------
if __name__ == "__main__":
    key = jax.random.PRNGKey(0)
    k_x, k_w1, k_b1, k_w2, k_b2, k_wl, k_bl = jax.random.split(key, 7)

    N, C, H, W = 2, 3, 16, 16
    flat_dim = 11 * (H - 6) * (W - 6)  # 1100 (small stand-in for 2816396)

    x = jax.random.normal(k_x, (N, C, H, W), dtype=jnp.float32)

    params = (
        jax.random.normal(k_w1, (7, 3, 4, 4), dtype=jnp.float32) * 0.1,
        jax.random.normal(k_b1, (7,), dtype=jnp.float32) * 0.1,
        jax.random.normal(k_w2, (11, 7, 4, 4), dtype=jnp.float32) * 0.1,
        jax.random.normal(k_b2, (11,), dtype=jnp.float32) * 0.1,
        jax.random.normal(k_wl, (13, flat_dim), dtype=jnp.float32) * 0.02,
        jax.random.normal(k_bl, (13,), dtype=jnp.float32) * 0.1,
    )

    fwd = jax.jit(image_classifier_forward)
    out = jax.block_until_ready(fwd(x, params))
    ref = jax.block_until_ready(_reference_forward(x, params))

    assert out.shape == (N, 13), out.shape
    assert jnp.allclose(out, ref, rtol=1e-4, atol=1e-4), "mismatch vs reference"

    print("KERNEL_OK")
</pallas_src>

<mosaic_0001>
module attributes {stable_mosaic.version = 11 : i64} {
  func.func @_fused_classifier_kernel(%arg0: memref<26x192xf32, #tpu.memory_space<vmem>>, %arg1: memref<192x128xf32, #tpu.memory_space<vmem>>, %arg2: memref<1x128xf32, #tpu.memory_space<vmem>>, %arg3: memref<4x128x128xf32, #tpu.memory_space<vmem>>, %arg4: memref<1x128xf32, #tpu.memory_space<vmem>>, %arg5: memref<1280x128xf32, #tpu.memory_space<vmem>>, %arg6: memref<1x128xf32, #tpu.memory_space<vmem>>, %arg7: memref<2x128xf32, #tpu.memory_space<vmem>>, %arg8: memref<26x128xf32, #tpu.memory_space<vmem>>, %arg9: memref<20x128xf32, #tpu.memory_space<vmem>>, %arg10: memref<2x1280xf32, #tpu.memory_space<vmem>>) attributes {dimension_semantics = [], scalar_prefetch = 0 : i64, scratch_operands = 3 : i64, tpu.core_type = #tpu.core_type<tc>} {
    %c0 = arith.constant 0 : index
    %c0_0 = arith.constant 0 : index
    %0 = vector.load %arg0[%c0, %c0_0] : memref<26x192xf32, #tpu.memory_space<vmem>>, vector<26x192xf32>
    %c0_1 = arith.constant 0 : index
    %c0_2 = arith.constant 0 : index
    %1 = vector.load %arg1[%c0_1, %c0_2] : memref<192x128xf32, #tpu.memory_space<vmem>>, vector<192x128xf32>
    %cst = arith.constant dense<0.000000e+00> : vector<26x128xf32>
    %2 = tpu.matmul %0, %1, %cst {dimension_numbers = #tpu.dot_dimension_numbers<[1], [0], [0], [1], [0, 0, 1, 1], [], []>} : vector<26x192xf32>, vector<192x128xf32>, vector<26x128xf32> -> vector<26x128xf32>
    %c0_3 = arith.constant 0 : index
    %c0_4 = arith.constant 0 : index
    %3 = vector.load %arg2[%c0_3, %c0_4] : memref<1x128xf32, #tpu.memory_space<vmem>>, vector<1x128xf32>
    %4 = vector.broadcast %3 : vector<1x128xf32> to vector<26x128xf32>
    %5 = arith.addf %2, %4 : vector<26x128xf32>
    %cst_5 = arith.constant 0.000000e+00 : f32
    %6 = vector.broadcast %cst_5 : f32 to vector<26x128xf32>
    %7 = arith.maximumf %5, %6 : vector<26x128xf32>
    %c0_6 = arith.constant 0 : index
    %c0_7 = arith.constant 0 : index
    %8 = vector.load %arg8[%c0_6, %c0_7] : memref<26x128xf32, #tpu.memory_space<vmem>>, vector<26x128xf32>
    tpu.vector_store %arg8[%c0_6, %c0_7], %7 {strides = array<i32>} : memref<26x128xf32, #tpu.memory_space<vmem>>, vector<26x128xf32>,
    %c0_8 = arith.constant 0 : index
    %c0_9 = arith.constant 0 : index
    %9 = vector.load %arg8[%c0_8, %c0_9] : memref<26x128xf32, #tpu.memory_space<vmem>>, vector<20x128xf32>
    %c0_10 = arith.constant 0 : index
    %c0_11 = arith.constant 0 : index
    %c0_12 = arith.constant 0 : index
    %10 = vector.load %arg3[%c0_10, %c0_11, %c0_12] : memref<4x128x128xf32, #tpu.memory_space<vmem>>, vector<1x128x128xf32>
    %11 = vector.shape_cast %10 : vector<1x128x128xf32> to vector<128x128xf32>
    %cst_13 = arith.constant dense<0.000000e+00> : vector<20x128xf32>
    %12 = tpu.matmul %9, %11, %cst_13 {dimension_numbers = #tpu.dot_dimension_numbers<[1], [0], [0], [1], [0, 0, 1, 1], [], []>} : vector<20x128xf32>, vector<128x128xf32>, vector<20x128xf32> -> vector<20x128xf32>
    %c2 = arith.constant 2 : index
    %c0_14 = arith.constant 0 : index
    %13 = vector.load %arg8[%c2, %c0_14] : memref<26x128xf32, #tpu.memory_space<vmem>>, vector<20x128xf32>
    %c1 = arith.constant 1 : index
    %c0_15 = arith.constant 0 : index
    %c0_16 = arith.constant 0 : index
    %14 = vector.load %arg3[%c1, %c0_15, %c0_16] : memref<4x128x128xf32, #tpu.memory_space<vmem>>, vector<1x128x128xf32>
    %15 = vector.shape_cast %14 : vector<1x128x128xf32> to vector<128x128xf32>
    %cst_17 = arith.constant dense<0.000000e+00> : vector<20x128xf32>
    %16 = tpu.matmul %13, %15, %cst_17 {dimension_numbers = #tpu.dot_dimension_numbers<[1], [0], [0], [1], [0, 0, 1, 1], [], []>} : vector<20x128xf32>, vector<128x128xf32>, vector<20x128xf32> -> vector<20x128xf32>
    %17 = arith.addf %12, %16 : vector<20x128xf32>
    %c4 = arith.constant 4 : index
    %c0_18 = arith.constant 0 : index
    %18 = vector.load %arg8[%c4, %c0_18] : memref<26x128xf32, #tpu.memory_space<vmem>>, vector<20x128xf32>
    %c2_19 = arith.constant 2 : index
    %c0_20 = arith.constant 0 : index
    %c0_21 = arith.constant 0 : index
    %19 = vector.load %arg3[%c2_19, %c0_20, %c0_21] : memref<4x128x128xf32, #tpu.memory_space<vmem>>, vector<1x128x128xf32>
    %20 = vector.shape_cast %19 : vector<1x128x128xf32> to vector<128x128xf32>
    %cst_22 = arith.constant dense<0.000000e+00> : vector<20x128xf32>
    %21 = tpu.matmul %18, %20, %cst_22 {dimension_numbers = #tpu.dot_dimension_numbers<[1], [0], [0], [1], [0, 0, 1, 1], [], []>} : vector<20x128xf32>, vector<128x128xf32>, vector<20x128xf32> -> vector<20x128xf32>
    %22 = arith.addf %17, %21 : vector<20x128xf32>
    %c6 = arith.constant 6 : index
    %c0_23 = arith.constant 0 : index
    %23 = vector.load %arg8[%c6, %c0_23] : memref<26x128xf32, #tpu.memory_space<vmem>>, vector<20x128xf32>
    %c3 = arith.constant 3 : index
    %c0_24 = arith.constant 0 : index
    %c0_25 = arith.constant 0 : index
    %24 = vector.load %arg3[%c3, %c0_24, %c0_25] : memref<4x128x128xf32, #tpu.memory_space<vmem>>, vector<1x128x128xf32>
    %25 = vector.shape_cast %24 : vector<1x128x128xf32> to vector<128x128xf32>
    %cst_26 = arith.constant dense<0.000000e+00> : vector<20x128xf32>
    %26 = tpu.matmul %23, %25, %cst_26 {dimension_numbers = #tpu.dot_dimension_numbers<[1], [0], [0], [1], [0, 0, 1, 1], [], []>} : vector<20x128xf32>, vector<128x128xf32>, vector<20x128xf32> -> vector<20x128xf32>
    %27 = arith.addf %22, %26 : vector<20x128xf32>
    %c0_27 = arith.constant 0 : index
    %c0_28 = arith.constant 0 : index
    %28 = vector.load %arg4[%c0_27, %c0_28] : memref<1x128xf32, #tpu.memory_space<vmem>>, vector<1x128xf32>
    %29 = vector.broadcast %28 : vector<1x128xf32> to vector<20x128xf32>
    %30 = arith.addf %27, %29 : vector<20x128xf32>
    %cst_29 = arith.constant 0.000000e+00 : f32
    %31 = vector.broadcast %cst_29 : f32 to vector<20x128xf32>
    %32 = arith.maximumf %30, %31 : vector<20x128xf32>
    %c0_30 = arith.constant 0 : index
    %c0_31 = arith.constant 0 : index
    %33 = vector.load %arg9[%c0_30, %c0_31] : memref<20x128xf32, #tpu.memory_space<vmem>>, vector<20x128xf32>
    tpu.vector_store %arg9[%c0_30, %c0_31], %32 {strides = array<i32>} : memref<20x128xf32, #tpu.memory_space<vmem>>, vector<20x128xf32>,
    %c0_32 = arith.constant 0 : index
    %c0_33 = arith.constant 0 : index
    %34 = vector.load %arg9[%c0_32, %c0_33] : memref<20x128xf32, #tpu.memory_space<vmem>>, vector<2x128xf32>
    %c0_34 = arith.constant 0 : index
    %c0_35 = arith.constant 0 : index
    %35 = vector.load %arg10[%c0_34, %c0_35] : memref<2x1280xf32, #tpu.memory_space<vmem>>, vector<2x128xf32>
    tpu.vector_store %arg10[%c0_34, %c0_35], %34 {strides = array<i32>} : memref<2x1280xf32, #tpu.memory_space<vmem>>, vector<2x128xf32>,
    %c2_36 = arith.constant 2 : index
    %c0_37 = arith.constant 0 : index
    %36 = vector.load %arg9[%c2_36, %c0_37] : memref<20x128xf32, #tpu.memory_space<vmem>>, vector<2x128xf32>
    %c0_38 = arith.constant 0 : index
    %c128 = arith.constant 128 : index
    %37 = vector.load %arg10[%c0_38, %c128] : memref<2x1280xf32, #tpu.memory_space<vmem>>, vector<2x128xf32>
    tpu.vector_store %arg10[%c0_38, %c128], %36 {strides = array<i32>} : memref<2x1280xf32, #tpu.memory_space<vmem>>, vector<2x128xf32>,
    %c4_39 = arith.constant 4 : index
    %c0_40 = arith.constant 0 : index
    %38 = vector.load %arg9[%c4_39, %c0_40] : memref<20x128xf32, #tpu.memory_space<vmem>>, vector<2x128xf32>
    %c0_41 = arith.constant 0 : index
    %c256 = arith.constant 256 : index
    %39 = vector.load %arg10[%c0_41, %c256] : memref<2x1280xf32, #tpu.memory_space<vmem>>, vector<2x128xf32>
    tpu.vector_store %arg10[%c0_41, %c256], %38 {strides = array<i32>} : memref<2x1280xf32, #tpu.memory_space<vmem>>, vector<2x128xf32>,
    %c6_42 = arith.constant 6 : index
    %c0_43 = arith.constant 0 : index
    %40 = vector.load %arg9[%c6_42, %c0_43] : memref<20x128xf32, #tpu.memory_space<vmem>>, vector<2x128xf32>
    %c0_44 = arith.constant 0 : index
    %c384 = arith.constant 384 : index
    %41 = vector.load %arg10[%c0_44, %c384] : memref<2x1280xf32, #tpu.memory_space<vmem>>, vector<2x128xf32>
    tpu.vector_store %arg10[%c0_44, %c384], %40 {strides = array<i32>} : memref<2x1280xf32, #tpu.memory_space<vmem>>, vector<2x128xf32>,
    %c8 = arith.constant 8 : index
    %c0_45 = arith.constant 0 : index
    %42 = vector.load %arg9[%c8, %c0_45] : memref<20x128xf32, #tpu.memory_space<vmem>>, vector<2x128xf32>
    %c0_46 = arith.constant 0 : index
    %c512 = arith.constant 512 : index
    %43 = vector.load %arg10[%c0_46, %c512] : memref<2x1280xf32, #tpu.memory_space<vmem>>, vector<2x128xf32>
    tpu.vector_store %arg10[%c0_46, %c512], %42 {strides = array<i32>} : memref<2x1280xf32, #tpu.memory_space<vmem>>, vector<2x128xf32>,
    %c10 = arith.constant 10 : index
    %c0_47 = arith.constant 0 : index
    %44 = vector.load %arg9[%c10, %c0_47] : memref<20x128xf32, #tpu.memory_space<vmem>>, vector<2x128xf32>
    %c0_48 = arith.constant 0 : index
    %c640 = arith.constant 640 : index
    %45 = vector.load %arg10[%c0_48, %c640] : memref<2x1280xf32, #tpu.memory_space<vmem>>, vector<2x128xf32>
    tpu.vector_store %arg10[%c0_48, %c640], %44 {strides = array<i32>} : memref<2x1280xf32, #tpu.memory_space<vmem>>, vector<2x128xf32>,
    %c12 = arith.constant 12 : index
    %c0_49 = arith.constant 0 : index
    %46 = vector.load %arg9[%c12, %c0_49] : memref<20x128xf32, #tpu.memory_space<vmem>>, vector<2x128xf32>
    %c0_50 = arith.constant 0 : index
    %c768 = arith.constant 768 : index
    %47 = vector.load %arg10[%c0_50, %c768] : memref<2x1280xf32, #tpu.memory_space<vmem>>, vector<2x128xf32>
    tpu.vector_store %arg10[%c0_50, %c768], %46 {strides = array<i32>} : memref<2x1280xf32, #tpu.memory_space<vmem>>, vector<2x128xf32>,
    %c14 = arith.constant 14 : index
    %c0_51 = arith.constant 0 : index
    %48 = vector.load %arg9[%c14, %c0_51] : memref<20x128xf32, #tpu.memory_space<vmem>>, vector<2x128xf32>
    %c0_52 = arith.constant 0 : index
    %c896 = arith.constant 896 : index
    %49 = vector.load %arg10[%c0_52, %c896] : memref<2x1280xf32, #tpu.memory_space<vmem>>, vector<2x128xf32>
    tpu.vector_store %arg10[%c0_52, %c896], %48 {strides = array<i32>} : memref<2x1280xf32, #tpu.memory_space<vmem>>, vector<2x128xf32>,
    %c16 = arith.constant 16 : index
    %c0_53 = arith.constant 0 : index
    %50 = vector.load %arg9[%c16, %c0_53] : memref<20x128xf32, #tpu.memory_space<vmem>>, vector<2x128xf32>
    %c0_54 = arith.constant 0 : index
    %c1024 = arith.constant 1024 : index
    %51 = vector.load %arg10[%c0_54, %c1024] : memref<2x1280xf32, #tpu.memory_space<vmem>>, vector<2x128xf32>
    tpu.vector_store %arg10[%c0_54, %c1024], %50 {strides = array<i32>} : memref<2x1280xf32, #tpu.memory_space<vmem>>, vector<2x128xf32>,
    %c18 = arith.constant 18 : index
    %c0_55 = arith.constant 0 : index
    %52 = vector.load %arg9[%c18, %c0_55] : memref<20x128xf32, #tpu.memory_space<vmem>>, vector<2x128xf32>
    %c0_56 = arith.constant 0 : index
    %c1152 = arith.constant 1152 : index
    %53 = vector.load %arg10[%c0_56, %c1152] : memref<2x1280xf32, #tpu.memory_space<vmem>>, vector<2x128xf32>
    tpu.vector_store %arg10[%c0_56, %c1152], %52 {strides = array<i32>} : memref<2x1280xf32, #tpu.memory_space<vmem>>, vector<2x128xf32>,
    %c0_57 = arith.constant 0 : index
    %c0_58 = arith.constant 0 : index
    %54 = vector.load %arg10[%c0_57, %c0_58] : memref<2x1280xf32, #tpu.memory_space<vmem>>, vector<2x1280xf32>
    %c0_59 = arith.constant 0 : index
    %c0_60 = arith.constant 0 : index
    %55 = vector.load %arg5[%c0_59, %c0_60] : memref<1280x128xf32, #tpu.memory_space<vmem>>, vector<1280x128xf32>
    %cst_61 = arith.constant dense<0.000000e+00> : vector<2x128xf32>
    %56 = tpu.matmul %54, %55, %cst_61 {dimension_numbers = #tpu.dot_dimension_numbers<[1], [0], [0], [1], [0, 0, 1, 1], [], []>} : vector<2x1280xf32>, vector<1280x128xf32>, vector<2x128xf32> -> vector<2x128xf32>
    %c0_62 = arith.constant 0 : index
    %c0_63 = arith.constant 0 : index
    %57 = vector.load %arg6[%c0_62, %c0_63] : memref<1x128xf32, #tpu.memory_space<vmem>>, vector<1x128xf32>
    %58 = vector.broadcast %57 : vector<1x128xf32> to vector<2x128xf32>
    %59 = arith.addf %56, %58 : vector<2x128xf32>
    %cst_64 = arith.constant dense<0xFF800000> : vector<128xf32>
    %60 = vector.multi_reduction <maximumf>, %59, %cst_64 [0] : vector<2x128xf32> to vector<128xf32>
    %61 = vector.shape_cast %60 : vector<128xf32> to vector<1x128xf32>
    %62 = vector.broadcast %61 : vector<1x128xf32> to vector<2x128xf32>
    %63 = arith.subf %59, %62 : vector<2x128xf32>
    %64 = math.exp %63 : vector<2x128xf32>
    %cst_65 = arith.constant dense<0.000000e+00> : vector<128xf32>
    %65 = vector.multi_reduction <add>, %64, %cst_65 [0] : vector<2x128xf32> to vector<128xf32>
    %66 = vector.shape_cast %65 : vector<128xf32> to vector<1x128xf32>
    %67 = tpu.reciprocal %66 : vector<1x128xf32> -> vector<1x128xf32>
    %68 = vector.broadcast %67 : vector<1x128xf32> to vector<2x128xf32>
    %69 = arith.mulf %64, %68 : vector<2x128xf32>
    %c0_66 = arith.constant 0 : index
    %c0_67 = arith.constant 0 : index
    %70 = vector.load %arg7[%c0_66, %c0_67] : memref<2x128xf32, #tpu.memory_space<vmem>>, vector<2x128xf32>
    tpu.vector_store %arg7[%c0_66, %c0_67], %69 {strides = array<i32>} : memref<2x128xf32, #tpu.memory_space<vmem>>, vector<2x128xf32>,
    return
  }
}

</mosaic_0001>

<llo_original>
// kernel: tile.18
$region0: #{tile.18}
  #allocation0 [shape = 's32[1]{0}', space=sflag, size = 0x4, scoped, tag = 'scoped memory for tile.18']
  %s0 = inlined_call_operand.vmem [shape: f32[11], index: 0, kind: input, shape index: {}]
  %s1 = inlined_call_operand.vmem [shape: f32[10,11], index: 1, kind: output, shape index: {}]
  // Predicated region
  $region2: #{tile.18} parent=0 // pred_check
    _
  $region3: #{tile.18} parent=0 // pred_check_branch
    %3 = sbr.rel (0) target = $region5
  $region4: #{tile.18} parent=0 // pred_region
    _
  $region5: #{tile.18} parent=0 // pred_fallthru
    _
  %v4 = vld [vmem:[%s0] ss:$0 sm:$0xff]
  %5 = vst [vmem:[%s1] sm:$0xff] %v4
  %s6 = scalar_lea.vmem %s1, 8
  %7 = vst [vmem:[%s6] sm:$0xff] %v4

// kernel: tile.19
$region0: #{tile.19}
  %s0 = inlined_call_operand.vmem [shape: f32[10,11], index: 0, kind: input, shape index: {}]
  %s1 = inlined_call_operand.vmem [shape: f32[110], index: 1, kind: output, shape index: {}]
  $region1: #{tile.19} parent=0
    #allocation0 [shape = 'u8[4096]{0}', space=vmem, size = 0x1000, scoped, tag = 'scoped mem for output reshape']
    %v2 = vld [vmem:[%s0] sm:$0x1]
    %vm3 = vcmask 89088
    %4 = vst.msk [vmem:[#allocation0] sm:$0x1] %vm3, %v2
    %s5 = scalar_lea.vmem %s0, 9
    %v6 = vld [vmem:[%s5] sm:$0x1]
    %7 = vrot.lane.b32.xlu0 %v6, 99
    %v8 = vpop.permute.xlu0 %7
    %vm9 = vcmask 900888
    %10 = vst.msk [vmem:[#allocation0] sm:$0x1] %vm9, %v8
    %s11 = scalar_lea.vmem %s0, 8
    %v12 = vld [vmem:[%s11] sm:$0x1]
    %13 = vrot.lane.b32.xlu0 %v12, 88
    %v14 = vpop.permute.xlu0 %13
    %vm15 = vcmask 810688
    %16 = vst.msk [vmem:[#allocation0] sm:$0x1] %vm15, %v14
    %s17 = scalar_lea.vmem %s0, 7
    %v18 = vld [vmem:[%s17] sm:$0x1]
    %19 = vrot.lane.b32.xlu0 %v18, 77
    %v20 = vpop.permute.xlu0 %19
    %vm21 = vcmask 720488
    %22 = vst.msk [vmem:[#allocation0] sm:$0x1] %vm21, %v20
    %s23 = scalar_lea.vmem %s0, 6
    %v24 = vld [vmem:[%s23] sm:$0x1]
    %25 = vrot.lane.b32.xlu0 %v24, 66
    %v26 = vpop.permute.xlu0 %25
    %vm27 = vcmask 630288
    %28 = vst.msk [vmem:[#allocation0] sm:$0x1] %vm27, %v26
    %s29 = scalar_lea.vmem %s0, 5
    %v30 = vld [vmem:[%s29] sm:$0x1]
    %31 = vrot.lane.b32.xlu0 %v30, 55
    %v32 = vpop.permute.xlu0 %31
    %vm33 = vcmask 540088
    %34 = vst.msk [vmem:[#allocation0] sm:$0x1] %vm33, %v32
    %s35 = scalar_lea.vmem %s0, 4
    %v36 = vld [vmem:[%s35] sm:$0x1]
    %37 = vrot.lane.b32.xlu0 %v36, 44
    %v38 = vpop.permute.xlu0 %37
    %vm39 = vcmask 449888
    %40 = vst.msk [vmem:[#allocation0] sm:$0x1] %vm39, %v38
    %s41 = scalar_lea.vmem %s0, 3
    %v42 = vld [vmem:[%s41] sm:$0x1]
    %43 = vrot.lane.b32.xlu0 %v42, 33
    %v44 = vpop.permute.xlu0 %43
    %vm45 = vcmask 359688
    %46 = vst.msk [vmem:[#allocation0] sm:$0x1] %vm45, %v44
    %s47 = scalar_lea.vmem %s0, 2
    %v48 = vld [vmem:[%s47] sm:$0x1]
    %49 = vrot.lane.b32.xlu0 %v48, 22
    %v50 = vpop.permute.xlu0 %49
    %vm51 = vcmask 269488
    %52 = vst.msk [vmem:[#allocation0] sm:$0x1] %vm51, %v50
    %s53 = scalar_lea.vmem %s0, 1
    %v54 = vld [vmem:[%s53] sm:$0x1]
    %55 = vrot.lane.b32.xlu0 %v54, 11
    %v56 = vpop.permute.xlu0 %55
    %vm57 = vcmask 179288
    %58 = vst.msk [vmem:[#allocation0] sm:$0x1] %vm57, %v56
    %s60 = ssub.s32 2, 1
    %v61 = vld [vmem:[#allocation0] sm:%s60]
    %s63 = ssub.s32 2, 1
    %64 = vst [vmem:[%s1] sm:%s63] %v61

// kernel: tile.13
$region0: #{tile.13}
  #allocation0 [shape = 's32[1]{0}', space=sflag, size = 0x4, scoped, tag = 'scoped memory for tile.13']
  %s0 = inlined_call_operand.vmem [shape: f32[7], index: 0, kind: input, shape index: {}]
  %s1 = inlined_call_operand.vmem [shape: f32[13,7], index: 1, kind: output, shape index: {}]
  // Predicated region
  $region2: #{tile.13} parent=0 // pred_check
    _
  $region3: #{tile.13} parent=0 // pred_check_branch
    %3 = sbr.rel (0) target = $region5
  $region4: #{tile.13} parent=0 // pred_region
    _
  $region5: #{tile.13} parent=0 // pred_fallthru
    _
  %v4 = vld [vmem:[%s0] ss:$0 sm:$0xff]
  %5 = vst [vmem:[%s1] sm:$0xff] %v4
  %s6 = scalar_lea.vmem %s1, 8
  %7 = vst [vmem:[%s6] sm:$0xff] %v4

// kernel: tile.14
$region0: #{tile.14}
  %s0 = inlined_call_operand.vmem [shape: f32[13,7], index: 0, kind: input, shape index: {}]
  %s1 = inlined_call_operand.vmem [shape: f32[91], index: 1, kind: output, shape index: {}]
  $region1: #{tile.14} parent=0
    #allocation0 [shape = 'u8[4096]{0}', space=vmem, size = 0x1000, scoped, tag = 'scoped mem for output reshape']
    %v2 = vld [vmem:[%s0] sm:$0x1]
    %vm3 = vcmask 56320
    %4 = vst.msk [vmem:[#allocation0] sm:$0x1] %vm3, %v2
    %s5 = scalar_lea.vmem %s0, 12
    %v6 = vld [vmem:[%s5] sm:$0x1]
    %7 = vrot.lane.b32.xlu0 %v6, 84
    %v8 = vpop.permute.xlu0 %7
    %vm9 = vcmask 745120
    %10 = vst.msk [vmem:[#allocation0] sm:$0x1] %vm9, %v8
    %s11 = scalar_lea.vmem %s0, 11
    %v12 = vld [vmem:[%s11] sm:$0x1]
    %13 = vrot.lane.b32.xlu0 %v12, 77
    %v14 = vpop.permute.xlu0 %13
    %vm15 = vcmask 687720
    %16 = vst.msk [vmem:[#allocation0] sm:$0x1] %vm15, %v14
    %s17 = scalar_lea.vmem %s0, 10
    %v18 = vld [vmem:[%s17] sm:$0x1]
    %19 = vrot.lane.b32.xlu0 %v18, 70
    %v20 = vpop.permute.xlu0 %19
    %vm21 = vcmask 630320
    %22 = vst.msk [vmem:[#allocation0] sm:$0x1] %vm21, %v20
    %s23 = scalar_lea.vmem %s0, 9
    %v24 = vld [vmem:[%s23] sm:$0x1]
    %25 = vrot.lane.b32.xlu0 %v24, 63
    %v26 = vpop.permute.xlu0 %25
    %vm27 = vcmask 572920
    %28 = vst.msk [vmem:[#allocation0] sm:$0x1] %vm27, %v26
    %s29 = scalar_lea.vmem %s0, 8
    %v30 = vld [vmem:[%s29] sm:$0x1]
    %31 = vrot.lane.b32.xlu0 %v30, 56
    %v32 = vpop.permute.xlu0 %31
    %vm33 = vcmask 515520
    %34 = vst.msk [vmem:[#allocation0] sm:$0x1] %vm33, %v32
    %s35 = scalar_lea.vmem %s0, 7
    %v36 = vld [vmem:[%s35] sm:$0x1]
    %37 = vrot.lane.b32.xlu0 %v36, 49
    %v38 = vpop.permute.xlu0 %37
    %vm39 = vcmask 458120
    %40 = vst.msk [vmem:[#allocation0] sm:$0x1] %vm39, %v38
    %s41 = scalar_lea.vmem %s0, 6
    %v42 = vld [vmem:[%s41] sm:$0x1]
    %43 = vrot.lane.b32.xlu0 %v42, 42
    %v44 = vpop.permute.xlu0 %43
    %vm45 = vcmask 400720
    %46 = vst.msk [vmem:[#allocation0] sm:$0x1] %vm45, %v44
    %s47 = scalar_lea.vmem %s0, 5
    %v48 = vld [vmem:[%s47] sm:$0x1]
    %49 = vrot.lane.b32.xlu0 %v48, 35
    %v50 = vpop.permute.xlu0 %49
    %vm51 = vcmask 343320
    %52 = vst.msk [vmem:[#allocation0] sm:$0x1] %vm51, %v50
    %s53 = scalar_lea.vmem %s0, 4
    %v54 = vld [vmem:[%s53] sm:$0x1]
    %55 = vrot.lane.b32.xlu0 %v54, 28
    %v56 = vpop.permute.xlu0 %55
    %vm57 = vcmask 285920
    %58 = vst.msk [vmem:[#allocation0] sm:$0x1] %vm57, %v56
    %s59 = scalar_lea.vmem %s0, 3
    %v60 = vld [vmem:[%s59] sm:$0x1]
    %61 = vrot.lane.b32.xlu0 %v60, 21
    %v62 = vpop.permute.xlu0 %61
    %vm63 = vcmask 228520
    %64 = vst.msk [vmem:[#allocation0] sm:$0x1] %vm63, %v62
    %s65 = scalar_lea.vmem %s0, 2
    %v66 = vld [vmem:[%s65] sm:$0x1]
    %67 = vrot.lane.b32.xlu0 %v66, 14
    %v68 = vpop.permute.xlu0 %67
    %vm69 = vcmask 171120
    %70 = vst.msk [vmem:[#allocation0] sm:$0x1] %vm69, %v68
    %s71 = scalar_lea.vmem %s0, 1
    %v72 = vld [vmem:[%s71] sm:$0x1]
    %73 = vrot.lane.b32.xlu0 %v72, 7
    %v74 = vpop.permute.xlu0 %73
    %vm75 = vcmask 113720
    %76 = vst.msk [vmem:[#allocation0] sm:$0x1] %vm75, %v74
    %s78 = ssub.s32 2, 1
    %v79 = vld [vmem:[#allocation0] sm:%s78]
    %s81 = ssub.s32 2, 1
    %82 = vst [vmem:[%s1] sm:%s81] %v79

// kernel: image_classifier_forward.1
$region0: #{image_classifier_forward.1}
  #allocation0 [shape = 'u32[]', space=smem, size = 0x4, offset = 0x4, fixed_abs, tag = 'smem constant byte address 0x4 - core index']
  #allocation1 [shape = 'u32[72,128]{1,0:T(1,128)}', space=vmem, size = 0x9000, scoped, tag = 'internal scratch']
  #allocation2 [shape = 'f32[26,128]{1,0:T(8,128)}', space=vmem, size = 0x4000, scoped, tag = 'scratch operand']
  #allocation3 [shape = 'f32[20,128]{1,0:T(8,128)}', space=vmem, size = 0x3000, scoped, tag = 'scratch operand']
  #allocation4 [shape = 'f32[2,1280]{1,0:T(2,128)}', space=vmem, size = 0x2800, scoped, tag = 'scratch operand']
  %s0 = inlined_call_operand.vmem [shape: f32[26,192], index: 0, kind: input, shape index: {}]
  %s1 = inlined_call_operand.vmem [shape: f32[192,128], index: 1, kind: input, shape index: {}]
  %s2 = inlined_call_operand.vmem [shape: f32[1,128], index: 2, kind: input, shape index: {}]
  %s3 = inlined_call_operand.vmem [shape: f32[4,128,128], index: 3, kind: input, shape index: {}]
  %s4 = inlined_call_operand.vmem [shape: f32[1,128], index: 4, kind: input, shape index: {}]
  %s5 = inlined_call_operand.vmem [shape: f32[1280,128], index: 5, kind: input, shape index: {}]
  %s6 = inlined_call_operand.vmem [shape: f32[1,128], index: 6, kind: input, shape index: {}]
  %s7 = inlined_call_operand.hbm [shape: f32[2,128], index: 7, kind: output, shape index: {}]
  %s8 = sld [smem:[#allocation0]]
  $region38: #{image_classifier_forward.1} parent=0
    _
  %s10 = ssub.s32 1, %s8
  %s11 = scalar_select 0, %s10, %s8
  $region1: #{image_classifier_forward.1} parent=0
    #allocation5 [shape = 'u8[1024]{0}', space=vmem, size = 0x400, scoped, tag = 'output window, operand 0, single buffered']
    #allocation6 [shape = 's32[1]{0}', space=sflag, size = 0x4, scoped, tag = 'scoped memory for image_classifier_forward.1']
    %12 = vsyncpa [#allocation6], 0
    // Predicated region
    $region2: #{image_classifier_forward.1} parent=1 // pred_check
      _
    $region3: #{image_classifier_forward.1} parent=1 // pred_check_branch
      %14 = sbr.rel (0) target = $region5
    $region4: #{image_classifier_forward.1} parent=1 // pred_region
      _
    $region5: #{image_classifier_forward.1} parent=1 // pred_fallthru
      _
    // Predicated region
    $region6: #{image_classifier_forward.1} parent=1 // pred_check
      _
    $region7: #{image_classifier_forward.1} parent=1 // pred_check_branch
      %16 = sbr.rel (0) target = $region9
    $region8: #{image_classifier_forward.1} parent=1 // pred_region
      _
    $region9: #{image_classifier_forward.1} parent=1 // pred_fallthru
      _
    // Predicated region
    $region10: #{image_classifier_forward.1} parent=1 // pred_check
      _
    $region11: #{image_classifier_forward.1} parent=1 // pred_check_branch
      %18 = sbr.rel (0) target = $region13
    $region12: #{image_classifier_forward.1} parent=1 // pred_region
      _
    $region13: #{image_classifier_forward.1} parent=1 // pred_fallthru
      _
    // Predicated region
    $region14: #{image_classifier_forward.1} parent=1 // pred_check
      _
    $region15: #{image_classifier_forward.1} parent=1 // pred_check_branch
      %20 = sbr.rel (0) target = $region17
    $region16: #{image_classifier_forward.1} parent=1 // pred_region
      _
    $region17: #{image_classifier_forward.1} parent=1 // pred_fallthru
      _
    // Predicated region
    $region18: #{image_classifier_forward.1} parent=1 // pred_check
      _
    $region19: #{image_classifier_forward.1} parent=1 // pred_check_branch
      %22 = sbr.rel (0) target = $region21
    $region20: #{image_classifier_forward.1} parent=1 // pred_region
      _
    $region21: #{image_classifier_forward.1} parent=1 // pred_fallthru
      _
    // Predicated region
    $region22: #{image_classifier_forward.1} parent=1 // pred_check
      _
    $region23: #{image_classifier_forward.1} parent=1 // pred_check_branch
      %24 = sbr.rel (0) target = $region25
    $region24: #{image_classifier_forward.1} parent=1 // pred_region
      _
    $region25: #{image_classifier_forward.1} parent=1 // pred_fallthru
      _
    // Predicated region
    $region26: #{image_classifier_forward.1} parent=1 // pred_check
      _
    $region27: #{image_classifier_forward.1} parent=1 // pred_check_branch
      %26 = sbr.rel (0) target = $region29
    $region28: #{image_classifier_forward.1} parent=1 // pred_region
      _
    $region29: #{image_classifier_forward.1} parent=1 // pred_fallthru
      _
    %v27 = vld [vmem:[%s0] sm:$0xff]
    %v28 = vld [vmem:[%s0 + $0x8] sm:$0xff]
    %v29 = vld [vmem:[%s0 + $0x10] sm:$0xff]
    %v30 = vld [vmem:[%s0 + $0x18] sm:$0xff]
    %v31 = vld [vmem:[%s0 + $0x20] sm:$0xff]
    %v32 = vld [vmem:[%s0 + $0x28] sm:$0xff]
    %v33 = vld [vmem:[%s0 + $0x30] sm:$0x3]
    %v34 = vld [vmem:[%s0 + $0x38] sm:$0x3]
    %v35 = vld [vmem:[%s1] sm:$0xff]
    %v36 = vld [vmem:[%s1 + $0x8] sm:$0xff]
    %v37 = vld [vmem:[%s1 + $0x10] sm:$0xff]
    %v38 = vld [vmem:[%s1 + $0x18] sm:$0xff]
    %v39 = vld [vmem:[%s1 + $0x20] sm:$0xff]
    %v40 = vld [vmem:[%s1 + $0x28] sm:$0xff]
    %v41 = vld [vmem:[%s1 + $0x30] sm:$0xff]
    %v42 = vld [vmem:[%s1 + $0x38] sm:$0xff]
    %v43 = vld [vmem:[%s1 + $0x40] sm:$0xff]
    %v44 = vld [vmem:[%s1 + $0x48] sm:$0xff]
    %v45 = vld [vmem:[%s1 + $0x50] sm:$0xff]
    %v46 = vld [vmem:[%s1 + $0x58] sm:$0xff]
    %v47 = vld [vmem:[%s1 + $0x60] sm:$0xff]
    %v48 = vld [vmem:[%s1 + $0x68] sm:$0xff]
    %v49 = vld [vmem:[%s1 + $0x70] sm:$0xff]
    %v50 = vld [vmem:[%s1 + $0x78] sm:$0xff]
    %v51 = vld [vmem:[%s1 + $0x80] sm:$0xff]
    %v52 = vld [vmem:[%s1 + $0x88] sm:$0xff]
    %v53 = vld [vmem:[%s1 + $0x90] sm:$0xff]
    %v54 = vld [vmem:[%s1 + $0x98] sm:$0xff]
    %v55 = vld [vmem:[%s1 + $0xa0] sm:$0xff]
    %v56 = vld [vmem:[%s1 + $0xa8] sm:$0xff]
    %v57 = vld [vmem:[%s1 + $0xb0] sm:$0xff]
    %v58 = vld [vmem:[%s1 + $0xb8] sm:$0xff]
    %v59 = vld [vmem:[%s2] sm:$0x1]
    %v61 = vperm.slane %v59, 0
    %vm63 = vcmask 523264
    %v65 = vsel %vm63, %v28, 0
    %v68 = vsel %vm63, %v30, 0
    %v71 = vsel %vm63, %v32, 0
    %v74 = vsel %vm63, %v34, 0
    %76 = vmatpush.msra.mxu0 %v50
    %77 = vmatpush.msra.mxu0 %v49
    %78 = vmatpush.msra.mxu0 %v48
    %79 = vmatpush.msra.mxu0 %v47
    %80 = vmatpush.msra.mxu0 %v46
    %81 = vmatpush.msra.mxu0 %v45
    %82 = vmatpush.msra.mxu0 %v44
    %83 = vmatpush.msra.mxu0 %v43
    %84 = vmatpush.msra.mxu0 %v42
    %85 = vmatpush.msra.mxu0 %v41
    %86 = vmatpush.msra.mxu0 %v40
    %87 = vmatpush.msra.mxu0 %v39
    %88 = vmatpush.msra.mxu0 %v38
    %89 = vmatpush.msra.mxu0 %v37
    %90 = vmatpush.msra.mxu0 %v36
    %91 = vmatpush.msra.mxu0 %v35
    %92 = vmatmul.f32.gmra.mxu0 %v27
    %v93 = vpop.f32.mrf.mxu0
    %v94 = vadd.f32 %v61, %v93
    %95 = vmatmul.f32.gmra.mxu0 %v29
    %v96 = vpop.f32.mrf.mxu0
    %v97 = vadd.f32 %v61, %v96
    %98 = vmatmul.f32.gmra.mxu0 %v31
    %v99 = vpop.f32.mrf.mxu0
    %v100 = vadd.f32 %v61, %v99
    %101 = vmatmul.f32.gmra.mxu0 %v33
    %v102 = vpop.f32.mrf.mxu0
    %v103 = vadd.f32 %v61, %v102
    %104 = vdwg.mxu0
    %105 = vmatpush.msra.mxu0 0.0
    %106 = vmatpush.msra.mxu0 0.0
    %107 = vmatpush.msra.mxu0 0.0
    %108 = vmatpush.msra.mxu0 0.0
    %109 = vmatpush.msra.mxu0 0.0
    %110 = vmatpush.msra.mxu0 0.0
    %111 = vmatpush.msra.mxu0 0.0
    %112 = vmatpush.msra.mxu0 0.0
    %113 = vmatpush.msra.mxu0 %v58
    %114 = vmatpush.msra.mxu0 %v57
    %115 = vmatpush.msra.mxu0 %v56
    %116 = vmatpush.msra.mxu0 %v55
    %117 = vmatpush.msra.mxu0 %v54
    %118 = vmatpush.msra.mxu0 %v53
    %119 = vmatpush.msra.mxu0 %v52
    %120 = vmatpush.msra.mxu0 %v51
    %121 = vmatmul.f32.gmra.mxu0 %v65
    %v122 = vpop.f32.mrf.mxu0
    %v123 = vadd.f32 %v94, %v122
    %124 = vmatmul.f32.gmra.mxu0 %v68
    %v125 = vpop.f32.mrf.mxu0
    %v126 = vadd.f32 %v97, %v125
    %127 = vmatmul.f32.gmra.mxu0 %v71
    %v128 = vpop.f32.mrf.mxu0
    %v129 = vadd.f32 %v100, %v128
    %130 = vmatmul.f32.gmra.mxu0 %v74
    %v131 = vpop.f32.mrf.mxu0
    %v132 = vadd.f32 %v103, %v131
    %133 = vdwg.mxu0
    %v134 = vmax.f32 %v123, 0.0
    %v135 = vmax.f32 %v126, 0.0
    %v136 = vmax.f32 %v129, 0.0
    %v137 = vmax.f32 %v132, 0.0
    %138 = vst [vmem:[#allocation2] sm:$0xff] %v134
    %139 = vst [vmem:[#allocation2 + $0x8] sm:$0xff] %v135
    %140 = vst [vmem:[#allocation2 + $0x10] sm:$0xff] %v136
    %141 = vst [vmem:[#allocation2 + $0x18] sm:$0x3] %v137
    %v142 = vld [vmem:[#allocation2] sm:$0xff]
    %v143 = vld [vmem:[#allocation2 + $0x8] sm:$0xff]
    %v144 = vld [vmem:[#allocation2 + $0x10] sm:$0xf]
    %v145 = vld [vmem:[%s3] sm:$0xff]
    %v146 = vld [vmem:[%s3 + $0x8] sm:$0xff]
    %v147 = vld [vmem:[%s3 + $0x10] sm:$0xff]
    %v148 = vld [vmem:[%s3 + $0x18] sm:$0xff]
    %v149 = vld [vmem:[%s3 + $0x20] sm:$0xff]
    %v150 = vld [vmem:[%s3 + $0x28] sm:$0xff]
    %v151 = vld [vmem:[%s3 + $0x30] sm:$0xff]
    %v152 = vld [vmem:[%s3 + $0x38] sm:$0xff]
    %v153 = vld [vmem:[%s3 + $0x40] sm:$0xff]
    %v154 = vld [vmem:[%s3 + $0x48] sm:$0xff]
    %v155 = vld [vmem:[%s3 + $0x50] sm:$0xff]
    %v156 = vld [vmem:[%s3 + $0x58] sm:$0xff]
    %v157 = vld [vmem:[%s3 + $0x60] sm:$0xff]
    %v158 = vld [vmem:[%s3 + $0x68] sm:$0xff]
    %v159 = vld [vmem:[%s3 + $0x70] sm:$0xff]
    %v160 = vld [vmem:[%s3 + $0x78] sm:$0xff]
    %v161 = vld [vmem:[#allocation2 + $0x2] sm:$0xff]
    %v162 = vld [vmem:[#allocation2 + $0xa] sm:$0xff]
    %v163 = vld [vmem:[#allocation2 + $0x12] sm:$0xf]
    %s164 = scalar_lea.vmem %s3, 128
    %v165 = vld [vmem:[%s164] sm:$0xff]
    %v166 = vld [vmem:[%s164 + $0x8] sm:$0xff]
    %v167 = vld [vmem:[%s164 + $0x10] sm:$0xff]
    %v168 = vld [vmem:[%s164 + $0x18] sm:$0xff]
    %v169 = vld [vmem:[%s164 + $0x20] sm:$0xff]
    %v170 = vld [vmem:[%s164 + $0x28] sm:$0xff]
    %v171 = vld [vmem:[%s164 + $0x30] sm:$0xff]
    %v172 = vld [vmem:[%s164 + $0x38] sm:$0xff]
    %v173 = vld [vmem:[%s164 + $0x40] sm:$0xff]
    %v174 = vld [vmem:[%s164 + $0x48] sm:$0xff]
    %v175 = vld [vmem:[%s164 + $0x50] sm:$0xff]
    %v176 = vld [vmem:[%s164 + $0x58] sm:$0xff]
    %v177 = vld [vmem:[%s164 + $0x60] sm:$0xff]
    %v178 = vld [vmem:[%s164 + $0x68] sm:$0xff]
    %v179 = vld [vmem:[%s164 + $0x70] sm:$0xff]
    %v180 = vld [vmem:[%s164 + $0x78] sm:$0xff]
    %181 = vmatpush.msra.mxu0 %v180
    %182 = vmatpush.msra.mxu0 %v179
    %183 = vmatpush.msra.mxu0 %v178
    %184 = vmatpush.msra.mxu0 %v177
    %185 = vmatpush.msra.mxu0 %v176
    %186 = vmatpush.msra.mxu0 %v175
    %187 = vmatpush.msra.mxu0 %v174
    %188 = vmatpush.msra.mxu0 %v173
    %189 = vmatpush.msra.mxu0 %v172
    %190 = vmatpush.msra.mxu0 %v171
    %191 = vmatpush.msra.mxu0 %v170
    %192 = vmatpush.msra.mxu0 %v169
    %193 = vmatpush.msra.mxu0 %v168
    %194 = vmatpush.msra.mxu0 %v167
    %195 = vmatpush.msra.mxu0 %v166
    %196 = vmatpush.msra.mxu0 %v165
    %197 = vmatmul.f32.gmra.mxu0 %v161
    %v198 = vpop.f32.mrf.mxu0
    %v199 = vadd.f32 0.0, %v198
    %200 = vmatmul.f32.gmra.mxu0 %v162
    %v201 = vpop.f32.mrf.mxu0
    %v202 = vadd.f32 0.0, %v201
    %203 = vmatmul.f32.gmra.mxu0 %v163
    %v204 = vpop.f32.mrf.mxu0
    %v205 = vadd.f32 0.0, %v204
    %206 = vdwg.mxu0
    %207 = vmatpush.msra.mxu0 %v160
    %208 = vmatpush.msra.mxu0 %v159
    %209 = vmatpush.msra.mxu0 %v158
    %210 = vmatpush.msra.mxu0 %v157
    %211 = vmatpush.msra.mxu0 %v156
    %212 = vmatpush.msra.mxu0 %v155
    %213 = vmatpush.msra.mxu0 %v154
    %214 = vmatpush.msra.mxu0 %v153
    %215 = vmatpush.msra.mxu0 %v152
    %216 = vmatpush.msra.mxu0 %v151
    %217 = vmatpush.msra.mxu0 %v150
    %218 = vmatpush.msra.mxu0 %v149
    %219 = vmatpush.msra.mxu0 %v148
    %220 = vmatpush.msra.mxu0 %v147
    %221 = vmatpush.msra.mxu0 %v146
    %222 = vmatpush.msra.mxu0 %v145
    %223 = vmatmul.f32.gmra.mxu0 %v142
    %v224 = vpop.f32.mrf.mxu0
    %v225 = vadd.f32 %v199, %v224
    %226 = vmatmul.f32.gmra.mxu0 %v143
    %v227 = vpop.f32.mrf.mxu0
    %v228 = vadd.f32 %v202, %v227
    %229 = vmatmul.f32.gmra.mxu0 %v144
    %v230 = vpop.f32.mrf.mxu0
    %v231 = vadd.f32 %v205, %v230
    %232 = vdwg.mxu0
    %v233 = vld [vmem:[#allocation2 + $0x4] sm:$0xff]
    %v234 = vld [vmem:[#allocation2 + $0xc] sm:$0xff]
    %v235 = vld [vmem:[#allocation2 + $0x14] sm:$0xf]
    %s236 = scalar_lea.vmem %s3, 256
    %v237 = vld [vmem:[%s236] sm:$0xff]
    %v238 = vld [vmem:[%s236 + $0x8] sm:$0xff]
    %v239 = vld [vmem:[%s236 + $0x10] sm:$0xff]
    %v240 = vld [vmem:[%s236 + $0x18] sm:$0xff]
    %v241 = vld [vmem:[%s236 + $0x20] sm:$0xff]
    %v242 = vld [vmem:[%s236 + $0x28] sm:$0xff]
    %v243 = vld [vmem:[%s236 + $0x30] sm:$0xff]
    %v244 = vld [vmem:[%s236 + $0x38] sm:$0xff]
    %v245 = vld [vmem:[%s236 + $0x40] sm:$0xff]
    %v246 = vld [vmem:[%s236 + $0x48] sm:$0xff]
    %v247 = vld [vmem:[%s236 + $0x50] sm:$0xff]
    %v248 = vld [vmem:[%s236 + $0x58] sm:$0xff]
    %v249 = vld [vmem:[%s236 + $0x60] sm:$0xff]
    %v250 = vld [vmem:[%s236 + $0x68] sm:$0xff]
    %v251 = vld [vmem:[%s236 + $0x70] sm:$0xff]
    %v252 = vld [vmem:[%s236 + $0x78] sm:$0xff]
    %253 = vmatpush.msra.mxu0 %v252
    %254 = vmatpush.msra.mxu0 %v251
    %255 = vmatpush.msra.mxu0 %v250
    %256 = vmatpush.msra.mxu0 %v249
    %257 = vmatpush.msra.mxu0 %v248
    %258 = vmatpush.msra.mxu0 %v247
    %259 = vmatpush.msra.mxu0 %v246
    %260 = vmatpush.msra.mxu0 %v245
    %261 = vmatpush.msra.mxu0 %v244
    %262 = vmatpush.msra.mxu0 %v243
    %263 = vmatpush.msra.mxu0 %v242
    %264 = vmatpush.msra.mxu0 %v241
    %265 = vmatpush.msra.mxu0 %v240
    %266 = vmatpush.msra.mxu0 %v239
    %267 = vmatpush.msra.mxu0 %v238
    %268 = vmatpush.msra.mxu0 %v237
    %269 = vmatmul.f32.gmra.mxu0 %v233
    %v270 = vpop.f32.mrf.mxu0
    %v271 = vadd.f32 0.0, %v270
    %272 = vmatmul.f32.gmra.mxu0 %v234
    %v273 = vpop.f32.mrf.mxu0
    %v274 = vadd.f32 0.0, %v273
    %275 = vmatmul.f32.gmra.mxu0 %v235
    %v276 = vpop.f32.mrf.mxu0
    %v277 = vadd.f32 0.0, %v276
    %278 = vdwg.mxu0
    %v279 = vadd.f32 %v225, %v271
    %v280 = vadd.f32 %v228, %v274
    %v281 = vadd.f32 %v231, %v277
    %v282 = vld [vmem:[#allocation2 + $0x6] sm:$0xff]
    %v283 = vld [vmem:[#allocation2 + $0xe] sm:$0xff]
    %v284 = vld [vmem:[#allocation2 + $0x16] sm:$0xf]
    %s285 = scalar_lea.vmem %s3, 384
    %v286 = vld [vmem:[%s285] sm:$0xff]
    %v287 = vld [vmem:[%s285 + $0x8] sm:$0xff]
    %v288 = vld [vmem:[%s285 + $0x10] sm:$0xff]
    %v289 = vld [vmem:[%s285 + $0x18] sm:$0xff]
    %v290 = vld [vmem:[%s285 + $0x20] sm:$0xff]
    %v291 = vld [vmem:[%s285 + $0x28] sm:$0xff]
    %v292 = vld [vmem:[%s285 + $0x30] sm:$0xff]
    %v293 = vld [vmem:[%s285 + $0x38] sm:$0xff]
    %v294 = vld [vmem:[%s285 + $0x40] sm:$0xff]
    %v295 = vld [vmem:[%s285 + $0x48] sm:$0xff]
    %v296 = vld [vmem:[%s285 + $0x50] sm:$0xff]
    %v297 = vld [vmem:[%s285 + $0x58] sm:$0xff]
    %v298 = vld [vmem:[%s285 + $0x60] sm:$0xff]
    %v299 = vld [vmem:[%s285 + $0x68] sm:$0xff]
    %v300 = vld [vmem:[%s285 + $0x70] sm:$0xff]
    %v301 = vld [vmem:[%s285 + $0x78] sm:$0xff]
    %302 = vmatpush.msra.mxu0 %v301
    %303 = vmatpush.msra.mxu0 %v300
    %304 = vmatpush.msra.mxu0 %v299
    %305 = vmatpush.msra.mxu0 %v298
    %306 = vmatpush.msra.mxu0 %v297
    %307 = vmatpush.msra.mxu0 %v296
    %308 = vmatpush.msra.mxu0 %v295
    %309 = vmatpush.msra.mxu0 %v294
    %310 = vmatpush.msra.mxu0 %v293
    %311 = vmatpush.msra.mxu0 %v292
    %312 = vmatpush.msra.mxu0 %v291
    %313 = vmatpush.msra.mxu0 %v290
    %314 = vmatpush.msra.mxu0 %v289
    %315 = vmatpush.msra.mxu0 %v288
    %316 = vmatpush.msra.mxu0 %v287
    %317 = vmatpush.msra.mxu0 %v286
    %318 = vmatmul.f32.gmra.mxu0 %v282
    %v319 = vpop.f32.mrf.mxu0
    %v320 = vadd.f32 0.0, %v319
    %321 = vmatmul.f32.gmra.mxu0 %v283
    %v322 = vpop.f32.mrf.mxu0
    %v323 = vadd.f32 0.0, %v322
    %324 = vmatmul.f32.gmra.mxu0 %v284
    %v325 = vpop.f32.mrf.mxu0
    %v326 = vadd.f32 0.0, %v325
    %327 = vdwg.mxu0
    %v328 = vadd.f32 %v279, %v320
    %v329 = vadd.f32 %v280, %v323
    %v330 = vadd.f32 %v281, %v326
    %v331 = vld [vmem:[%s4] sm:$0x1]
    %v333 = vperm.slane %v331, 0
    %v335 = vadd.f32 %v328, %v333
    %v336 = vadd.f32 %v329, %v333
    %v337 = vadd.f32 %v330, %v333
    %v338 = vmax.f32 %v335, 0.0
    %v339 = vmax.f32 %v336, 0.0
    %v340 = vmax.f32 %v337, 0.0
    %341 = vst [vmem:[#allocation3] sm:$0xff] %v338
    %342 = vst [vmem:[#allocation3 + $0x8] sm:$0xff] %v339
    %343 = vst [vmem:[#allocation3 + $0x10] sm:$0xf] %v340
    %v344 = vld [vmem:[#allocation3] sm:$0x3]
    %345 = vst [vmem:[#allocation4] sm:$0x3] %v344
    %v346 = vld [vmem:[#allocation3 + $0x2] sm:$0x3]
    %347 = vst [vmem:[#allocation4 + $0x2] sm:$0x3] %v346
    %v348 = vld [vmem:[#allocation3 + $0x4] sm:$0x3]
    %349 = vst [vmem:[#allocation4 + $0x4] sm:$0x3] %v348
    %v350 = vld [vmem:[#allocation3 + $0x6] sm:$0x3]
    %351 = vst [vmem:[#allocation4 + $0x6] sm:$0x3] %v350
    %v352 = vld [vmem:[#allocation3 + $0x8] sm:$0x3]
    %353 = vst [vmem:[#allocation4 + $0x8] sm:$0x3] %v352
    %v354 = vld [vmem:[#allocation3 + $0xa] sm:$0x3]
    %355 = vst [vmem:[#allocation4 + $0xa] sm:$0x3] %v354
    %v356 = vld [vmem:[#allocation3 + $0xc] sm:$0x3]
    %357 = vst [vmem:[#allocation4 + $0xc] sm:$0x3] %v356
    %v358 = vld [vmem:[#allocation3 + $0xe] sm:$0x3]
    %359 = vst [vmem:[#allocation4 + $0xe] sm:$0x3] %v358
    %v360 = vld [vmem:[#allocation3 + $0x10] sm:$0x3]
    %361 = vst [vmem:[#allocation4 + $0x10] sm:$0x3] %v360
    %v362 = vld [vmem:[#allocation3 + $0x12] sm:$0x3]
    %363 = vst [vmem:[#allocation4 + $0x12] sm:$0x3] %v362
    %v364 = vld [vmem:[#allocation4] sm:$0xff]
    %v365 = vld [vmem:[#allocation4 + $0x8] sm:$0xff]
    %v366 = vld [vmem:[#allocation4 + $0x10] sm:$0xf]
    %v367 = vld [vmem:[%s5] sm:$0xff]
    %v368 = vld [vmem:[%s5 + $0x8] sm:$0xff]
    %v369 = vld [vmem:[%s5 + $0x10] sm:$0xff]
    %v370 = vld [vmem:[%s5 + $0x18] sm:$0xff]
    %v371 = vld [vmem:[%s5 + $0x20] sm:$0xff]
    %v372 = vld [vmem:[%s5 + $0x28] sm:$0xff]
    %v373 = vld [vmem:[%s5 + $0x30] sm:$0xff]
    %v374 = vld [vmem:[%s5 + $0x38] sm:$0xff]
    %v375 = vld [vmem:[%s5 + $0x40] sm:$0xff]
    %v376 = vld [vmem:[%s5 + $0x48] sm:$0xff]
    %v377 = vld [vmem:[%s5 + $0x50] sm:$0xff]
    %v378 = vld [vmem:[%s5 + $0x58] sm:$0xff]
    %v379 = vld [vmem:[%s5 + $0x60] sm:$0xff]
    %v380 = vld [vmem:[%s5 + $0x68] sm:$0xff]
    %v381 = vld [vmem:[%s5 + $0x70] sm:$0xff]
    %v382 = vld [vmem:[%s5 + $0x78] sm:$0xff]
    %v383 = vld [vmem:[%s5 + $0x80] sm:$0xff]
    %v384 = vld [vmem:[%s5 + $0x88] sm:$0xff]
    %v385 = vld [vmem:[%s5 + $0x90] sm:$0xff]
    %v386 = vld [vmem:[%s5 + $0x98] sm:$0xff]
    %v387 = vld [vmem:[%s5 + $0xa0] sm:$0xff]
    %v388 = vld [vmem:[%s5 + $0xa8] sm:$0xff]
    %v389 = vld [vmem:[%s5 + $0xb0] sm:$0xff]
    %v390 = vld [vmem:[%s5 + $0xb8] sm:$0xff]
    %v391 = vld [vmem:[%s5 + $0xc0] sm:$0xff]
    %v392 = vld [vmem:[%s5 + $0xc8] sm:$0xff]
    %v393 = vld [vmem:[%s5 + $0xd0] sm:$0xff]
    %v394 = vld [vmem:[%s5 + $0xd8] sm:$0xff]
    %v395 = vld [vmem:[%s5 + $0xe0] sm:$0xff]
    %v396 = vld [vmem:[%s5 + $0xe8] sm:$0xff]
    %v397 = vld [vmem:[%s5 + $0xf0] sm:$0xff]
    %v398 = vld [vmem:[%s5 + $0xf8] sm:$0xff]
    %v399 = vld [vmem:[%s5 + $0x100] sm:$0xff]
    %v400 = vld [vmem:[%s5 + $0x108] sm:$0xff]
    %v401 = vld [vmem:[%s5 + $0x110] sm:$0xff]
    %v402 = vld [vmem:[%s5 + $0x118] sm:$0xff]
    %v403 = vld [vmem:[%s5 + $0x120] sm:$0xff]
    %v404 = vld [vmem:[%s5 + $0x128] sm:$0xff]
    %v405 = vld [vmem:[%s5 + $0x130] sm:$0xff]
    %v406 = vld [vmem:[%s5 + $0x138] sm:$0xff]
    %v407 = vld [vmem:[%s5 + $0x140] sm:$0xff]
    %v408 = vld [vmem:[%s5 + $0x148] sm:$0xff]
    %v409 = vld [vmem:[%s5 + $0x150] sm:$0xff]
    %v410 = vld [vmem:[%s5 + $0x158] sm:$0xff]
    %v411 = vld [vmem:[%s5 + $0x160] sm:$0xff]
    %v412 = vld [vmem:[%s5 + $0x168] sm:$0xff]
    %v413 = vld [vmem:[%s5 + $0x170] sm:$0xff]
    %v414 = vld [vmem:[%s5 + $0x178] sm:$0xff]
    %v415 = vld [vmem:[%s5 + $0x180] sm:$0xff]
    %v416 = vld [vmem:[%s5 + $0x188] sm:$0xff]
    %v417 = vld [vmem:[%s5 + $0x190] sm:$0xff]
    %v418 = vld [vmem:[%s5 + $0x198] sm:$0xff]
    %v419 = vld [vmem:[%s5 + $0x1a0] sm:$0xff]
    %v420 = vld [vmem:[%s5 + $0x1a8] sm:$0xff]
    %v421 = vld [vmem:[%s5 + $0x1b0] sm:$0xff]
    %v422 = vld [vmem:[%s5 + $0x1b8] sm:$0xff]
    %v423 = vld [vmem:[%s5 + $0x1c0] sm:$0xff]
    %v424 = vld [vmem:[%s5 + $0x1c8] sm:$0xff]
    %v425 = vld [vmem:[%s5 + $0x1d0] sm:$0xff]
    %v426 = vld [vmem:[%s5 + $0x1d8] sm:$0xff]
    %v427 = vld [vmem:[%s5 + $0x1e0] sm:$0xff]
    %v428 = vld [vmem:[%s5 + $0x1e8] sm:$0xff]
    %v429 = vld [vmem:[%s5 + $0x1f0] sm:$0xff]
    %v430 = vld [vmem:[%s5 + $0x1f8] sm:$0xff]
    %v431 = vld [vmem:[%s5 + $0x200] sm:$0xff]
    %v432 = vld [vmem:[%s5 + $0x208] sm:$0xff]
    %v433 = vld [vmem:[%s5 + $0x210] sm:$0xff]
    %v434 = vld [vmem:[%s5 + $0x218] sm:$0xff]
    %v435 = vld [vmem:[%s5 + $0x220] sm:$0xff]
    %v436 = vld [vmem:[%s5 + $0x228] sm:$0xff]
    %v437 = vld [vmem:[%s5 + $0x230] sm:$0xff]
    %v438 = vld [vmem:[%s5 + $0x238] sm:$0xff]
    %v439 = vld [vmem:[%s5 + $0x240] sm:$0xff]
    %v440 = vld [vmem:[%s5 + $0x248] sm:$0xff]
    %v441 = vld [vmem:[%s5 + $0x250] sm:$0xff]
    %v442 = vld [vmem:[%s5 + $0x258] sm:$0xff]
    %v443 = vld [vmem:[%s5 + $0x260] sm:$0xff]
    %v444 = vld [vmem:[%s5 + $0x268] sm:$0xff]
    %v445 = vld [vmem:[%s5 + $0x270] sm:$0xff]
    %v446 = vld [vmem:[%s5 + $0x278] sm:$0xff]
    %v447 = vld [vmem:[%s5 + $0x280] sm:$0xff]
    %v448 = vld [vmem:[%s5 + $0x288] sm:$0xff]
    %v449 = vld [vmem:[%s5 + $0x290] sm:$0xff]
    %v450 = vld [vmem:[%s5 + $0x298] sm:$0xff]
    %v451 = vld [vmem:[%s5 + $0x2a0] sm:$0xff]
    %v452 = vld [vmem:[%s5 + $0x2a8] sm:$0xff]
    %v453 = vld [vmem:[%s5 + $0x2b0] sm:$0xff]
    %v454 = vld [vmem:[%s5 + $0x2b8] sm:$0xff]
    %v455 = vld [vmem:[%s5 + $0x2c0] sm:$0xff]
    %v456 = vld [vmem:[%s5 + $0x2c8] sm:$0xff]
    %v457 = vld [vmem:[%s5 + $0x2d0] sm:$0xff]
    %v458 = vld [vmem:[%s5 + $0x2d8] sm:$0xff]
    %v459 = vld [vmem:[%s5 + $0x2e0] sm:$0xff]
    %v460 = vld [vmem:[%s5 + $0x2e8] sm:$0xff]
    %v461 = vld [vmem:[%s5 + $0x2f0] sm:$0xff]
    %v462 = vld [vmem:[%s5 + $0x2f8] sm:$0xff]
    %v463 = vld [vmem:[%s5 + $0x300] sm:$0xff]
    %v464 = vld [vmem:[%s5 + $0x308] sm:$0xff]
    %v465 = vld [vmem:[%s5 + $0x310] sm:$0xff]
    %v466 = vld [vmem:[%s5 + $0x318] sm:$0xff]
    %v467 = vld [vmem:[%s5 + $0x320] sm:$0xff]
    %v468 = vld [vmem:[%s5 + $0x328] sm:$0xff]
    %v469 = vld [vmem:[%s5 + $0x330] sm:$0xff]
    %v470 = vld [vmem:[%s5 + $0x338] sm:$0xff]
    %v471 = vld [vmem:[%s5 + $0x340] sm:$0xff]
    %v472 = vld [vmem:[%s5 + $0x348] sm:$0xff]
    %v473 = vld [vmem:[%s5 + $0x350] sm:$0xff]
    %v474 = vld [vmem:[%s5 + $0x358] sm:$0xff]
    %v475 = vld [vmem:[%s5 + $0x360] sm:$0xff]
    %v476 = vld [vmem:[%s5 + $0x368] sm:$0xff]
    %v477 = vld [vmem:[%s5 + $0x370] sm:$0xff]
    %v478 = vld [vmem:[%s5 + $0x378] sm:$0xff]
    %v479 = vld [vmem:[%s5 + $0x380] sm:$0xff]
    %v480 = vld [vmem:[%s5 + $0x388] sm:$0xff]
    %v481 = vld [vmem:[%s5 + $0x390] sm:$0xff]
    %v482 = vld [vmem:[%s5 + $0x398] sm:$0xff]
    %v483 = vld [vmem:[%s5 + $0x3a0] sm:$0xff]
    %v484 = vld [vmem:[%s5 + $0x3a8] sm:$0xff]
    %v485 = vld [vmem:[%s5 + $0x3b0] sm:$0xff]
    %v486 = vld [vmem:[%s5 + $0x3b8] sm:$0xff]
    %v487 = vld [vmem:[%s5 + $0x3c0] sm:$0xff]
    %v488 = vld [vmem:[%s5 + $0x3c8] sm:$0xff]
    %v489 = vld [vmem:[%s5 + $0x3d0] sm:$0xff]
    %v490 = vld [vmem:[%s5 + $0x3d8] sm:$0xff]
    %v491 = vld [vmem:[%s5 + $0x3e0] sm:$0xff]
    %v492 = vld [vmem:[%s5 + $0x3e8] sm:$0xff]
    %v493 = vld [vmem:[%s5 + $0x3f0] sm:$0xff]
    %v494 = vld [vmem:[%s5 + $0x3f8] sm:$0xff]
    %v495 = vld [vmem:[%s5 + $0x400] sm:$0xff]
    %v496 = vld [vmem:[%s5 + $0x408] sm:$0xff]
    %v497 = vld [vmem:[%s5 + $0x410] sm:$0xff]
    %v498 = vld [vmem:[%s5 + $0x418] sm:$0xff]
    %v499 = vld [vmem:[%s5 + $0x420] sm:$0xff]
    %v500 = vld [vmem:[%s5 + $0x428] sm:$0xff]
    %v501 = vld [vmem:[%s5 + $0x430] sm:$0xff]
    %v502 = vld [vmem:[%s5 + $0x438] sm:$0xff]
    %v503 = vld [vmem:[%s5 + $0x440] sm:$0xff]
    %v504 = vld [vmem:[%s5 + $0x448] sm:$0xff]
    %v505 = vld [vmem:[%s5 + $0x450] sm:$0xff]
    %v506 = vld [vmem:[%s5 + $0x458] sm:$0xff]
    %v507 = vld [vmem:[%s5 + $0x460] sm:$0xff]
    %v508 = vld [vmem:[%s5 + $0x468] sm:$0xff]
    %v509 = vld [vmem:[%s5 + $0x470] sm:$0xff]
    %v510 = vld [vmem:[%s5 + $0x478] sm:$0xff]
    %v511 = vld [vmem:[%s5 + $0x480] sm:$0xff]
    %v512 = vld [vmem:[%s5 + $0x488] sm:$0xff]
    %v513 = vld [vmem:[%s5 + $0x490] sm:$0xff]
    %v514 = vld [vmem:[%s5 + $0x498] sm:$0xff]
    %v515 = vld [vmem:[%s5 + $0x4a0] sm:$0xff]
    %v516 = vld [vmem:[%s5 + $0x4a8] sm:$0xff]
    %v517 = vld [vmem:[%s5 + $0x4b0] sm:$0xff]
    %v518 = vld [vmem:[%s5 + $0x4b8] sm:$0xff]
    %v519 = vld [vmem:[%s5 + $0x4c0] sm:$0xff]
    %v520 = vld [vmem:[%s5 + $0x4c8] sm:$0xff]
    %v521 = vld [vmem:[%s5 + $0x4d0] sm:$0xff]
    %v522 = vld [vmem:[%s5 + $0x4d8] sm:$0xff]
    %v523 = vld [vmem:[%s5 + $0x4e0] sm:$0xff]
    %v524 = vld [vmem:[%s5 + $0x4e8] sm:$0xff]
    %v525 = vld [vmem:[%s5 + $0x4f0] sm:$0xff]
    %v526 = vld [vmem:[%s5 + $0x4f8] sm:$0xff]
    %v527 = vld [vmem:[%s6] sm:$0x1]
    %v529 = vperm.slane %v527, 0
    %534 = vst [vmem:[#allocation1] ss:$4 sm:$0xff] %v364
    %s535 = scalar_lea.vmem [#allocation1], 32
    %536 = vst [vmem:[%s535] ss:$4 sm:$0xff] %v365
    %v537 = vld.sshfl [vmem:[#allocation1] sm:$0xff pattern:$0x73625140]
    %v538 = vld.sshfl [vmem:[#allocation1 + $0x8] sm:$0xff pattern:$0x73625140]
    %v539 = vld.sshfl [vmem:[#allocation1 + $0x10] sm:$0xff pattern:$0x73625140]
    %v540 = vld.sshfl [vmem:[#allocation1 + $0x18] sm:$0xff pattern:$0x73625140]
    %v541 = vld.sshfl [vmem:[#allocation1 + $0x20] sm:$0xff pattern:$0x73625140]
    %v542 = vld.sshfl [vmem:[#allocation1 + $0x28] sm:$0xff pattern:$0x73625140]
    %v543 = vld.sshfl [vmem:[#allocation1 + $0x30] sm:$0xff pattern:$0x73625140]
    %v544 = vld.sshfl [vmem:[#allocation1 + $0x38] sm:$0xff pattern:$0x73625140]
    %545 = vst [vmem:[#allocation1] ss:$4 sm:$0xff] %v366
    %v546 = vld.sshfl [vmem:[#allocation1] sm:$0xff pattern:$0x73625140]
    %v547 = vld.sshfl [vmem:[#allocation1 + $0x8] sm:$0xff pattern:$0x73625140]
    %558 = vmatpush.msra.mxu0 %v382
    %559 = vmatpush.msra.mxu0 %v381
    %560 = vmatpush.msra.mxu0 %v380
    %561 = vmatpush.msra.mxu0 %v379
    %562 = vmatpush.msra.mxu0 %v378
    %563 = vmatpush.msra.mxu0 %v377
    %564 = vmatpush.msra.mxu0 %v376
    %565 = vmatpush.msra.mxu0 %v375
    %566 = vmatpush.msra.mxu0 %v374
    %567 = vmatpush.msra.mxu0 %v373
    %568 = vmatpush.msra.mxu0 %v372
    %569 = vmatpush.msra.mxu0 %v371
    %570 = vmatpush.msra.mxu0 %v370
    %571 = vmatpush.msra.mxu0 %v369
    %572 = vmatpush.msra.mxu0 %v368
    %573 = vmatpush.msra.mxu0 %v367
    %574 = vmatmul.f32.gmra.mxu0 %v537
    %v575 = vpop.f32.mrf.mxu0
    %v576 = vadd.f32 %v529, %v575
    %577 = vdwg.mxu0
    %578 = vmatpush.msra.mxu0 %v398
    %579 = vmatpush.msra.mxu0 %v397
    %580 = vmatpush.msra.mxu0 %v396
    %581 = vmatpush.msra.mxu0 %v395
    %582 = vmatpush.msra.mxu0 %v394
    %583 = vmatpush.msra.mxu0 %v393
    %584 = vmatpush.msra.mxu0 %v392
    %585 = vmatpush.msra.mxu0 %v391
    %586 = vmatpush.msra.mxu0 %v390
    %587 = vmatpush.msra.mxu0 %v389
    %588 = vmatpush.msra.mxu0 %v388
    %589 = vmatpush.msra.mxu0 %v387
    %590 = vmatpush.msra.mxu0 %v386
    %591 = vmatpush.msra.mxu0 %v385
    %592 = vmatpush.msra.mxu0 %v384
    %593 = vmatpush.msra.mxu0 %v383
    %594 = vmatmul.f32.gmra.mxu0 %v538
    %v595 = vpop.f32.mrf.mxu0
    %v596 = vadd.f32 %v576, %v595
    %597 = vdwg.mxu0
    %598 = vmatpush.msra.mxu0 %v414
    %599 = vmatpush.msra.mxu0 %v413
    %600 = vmatpush.msra.mxu0 %v412
    %601 = vmatpush.msra.mxu0 %v411
    %602 = vmatpush.msra.mxu0 %v410
    %603 = vmatpush.msra.mxu0 %v409
    %604 = vmatpush.msra.mxu0 %v408
    %605 = vmatpush.msra.mxu0 %v407
    %606 = vmatpush.msra.mxu0 %v406
    %607 = vmatpush.msra.mxu0 %v405
    %608 = vmatpush.msra.mxu0 %v404
    %609 = vmatpush.msra.mxu0 %v403
    %610 = vmatpush.msra.mxu0 %v402
    %611 = vmatpush.msra.mxu0 %v401
    %612 = vmatpush.msra.mxu0 %v400
    %613 = vmatpush.msra.mxu0 %v399
    %614 = vmatmul.f32.gmra.mxu0 %v539
    %v615 = vpop.f32.mrf.mxu0
    %v616 = vadd.f32 %v596, %v615
    %617 = vdwg.mxu0
    %618 = vmatpush.msra.mxu0 %v430
    %619 = vmatpush.msra.mxu0 %v429
    %620 = vmatpush.msra.mxu0 %v428
    %621 = vmatpush.msra.mxu0 %v427
    %622 = vmatpush.msra.mxu0 %v426
    %623 = vmatpush.msra.mxu0 %v425
    %624 = vmatpush.msra.mxu0 %v424
    %625 = vmatpush.msra.mxu0 %v423
    %626 = vmatpush.msra.mxu0 %v422
    %627 = vmatpush.msra.mxu0 %v421
    %628 = vmatpush.msra.mxu0 %v420
    %629 = vmatpush.msra.mxu0 %v419
    %630 = vmatpush.msra.mxu0 %v418
    %631 = vmatpush.msra.mxu0 %v417
    %632 = vmatpush.msra.mxu0 %v416
    %633 = vmatpush.msra.mxu0 %v415
    %634 = vmatmul.f32.gmra.mxu0 %v540
    %v635 = vpop.f32.mrf.mxu0
    %v636 = vadd.f32 %v616, %v635
    %637 = vdwg.mxu0
    %638 = vmatpush.msra.mxu0 %v446
    %639 = vmatpush.msra.mxu0 %v445
    %640 = vmatpush.msra.mxu0 %v444
    %641 = vmatpush.msra.mxu0 %v443
    %642 = vmatpush.msra.mxu0 %v442
    %643 = vmatpush.msra.mxu0 %v441
    %644 = vmatpush.msra.mxu0 %v440
    %645 = vmatpush.msra.mxu0 %v439
    %646 = vmatpush.msra.mxu0 %v438
    %647 = vmatpush.msra.mxu0 %v437
    %648 = vmatpush.msra.mxu0 %v436
    %649 = vmatpush.msra.mxu0 %v435
    %650 = vmatpush.msra.mxu0 %v434
    %651 = vmatpush.msra.mxu0 %v433
    %652 = vmatpush.msra.mxu0 %v432
    %653 = vmatpush.msra.mxu0 %v431
    %654 = vmatmul.f32.gmra.mxu0 %v541
    %v655 = vpop.f32.mrf.mxu0
    %v656 = vadd.f32 %v636, %v655
    %657 = vdwg.mxu0
    %658 = vmatpush.msra.mxu0 %v462
    %659 = vmatpush.msra.mxu0 %v461
    %660 = vmatpush.msra.mxu0 %v460
    %661 = vmatpush.msra.mxu0 %v459
    %662 = vmatpush.msra.mxu0 %v458
    %663 = vmatpush.msra.mxu0 %v457
    %664 = vmatpush.msra.mxu0 %v456
    %665 = vmatpush.msra.mxu0 %v455
    %666 = vmatpush.msra.mxu0 %v454
    %667 = vmatpush.msra.mxu0 %v453
    %668 = vmatpush.msra.mxu0 %v452
    %669 = vmatpush.msra.mxu0 %v451
    %670 = vmatpush.msra.mxu0 %v450
    %671 = vmatpush.msra.mxu0 %v449
    %672 = vmatpush.msra.mxu0 %v448
    %673 = vmatpush.msra.mxu0 %v447
    %674 = vmatmul.f32.gmra.mxu0 %v542
    %v675 = vpop.f32.mrf.mxu0
    %v676 = vadd.f32 %v656, %v675
    %677 = vdwg.mxu0
    %678 = vmatpush.msra.mxu0 %v478
    %679 = vmatpush.msra.mxu0 %v477
    %680 = vmatpush.msra.mxu0 %v476
    %681 = vmatpush.msra.mxu0 %v475
    %682 = vmatpush.msra.mxu0 %v474
    %683 = vmatpush.msra.mxu0 %v473
    %684 = vmatpush.msra.mxu0 %v472
    %685 = vmatpush.msra.mxu0 %v471
    %686 = vmatpush.msra.mxu0 %v470
    %687 = vmatpush.msra.mxu0 %v469
    %688 = vmatpush.msra.mxu0 %v468
    %689 = vmatpush.msra.mxu0 %v467
    %690 = vmatpush.msra.mxu0 %v466
    %691 = vmatpush.msra.mxu0 %v465
    %692 = vmatpush.msra.mxu0 %v464
    %693 = vmatpush.msra.mxu0 %v463
    %694 = vmatmul.f32.gmra.mxu0 %v543
    %v695 = vpop.f32.mrf.mxu0
    %v696 = vadd.f32 %v676, %v695
    %697 = vdwg.mxu0
    %698 = vmatpush.msra.mxu0 %v494
    %699 = vmatpush.msra.mxu0 %v493
    %700 = vmatpush.msra.mxu0 %v492
    %701 = vmatpush.msra.mxu0 %v491
    %702 = vmatpush.msra.mxu0 %v490
    %703 = vmatpush.msra.mxu0 %v489
    %704 = vmatpush.msra.mxu0 %v488
    %705 = vmatpush.msra.mxu0 %v487
    %706 = vmatpush.msra.mxu0 %v486
    %707 = vmatpush.msra.mxu0 %v485
    %708 = vmatpush.msra.mxu0 %v484
    %709 = vmatpush.msra.mxu0 %v483
    %710 = vmatpush.msra.mxu0 %v482
    %711 = vmatpush.msra.mxu0 %v481
    %712 = vmatpush.msra.mxu0 %v480
    %713 = vmatpush.msra.mxu0 %v479
    %714 = vmatmul.f32.gmra.mxu0 %v544
    %v715 = vpop.f32.mrf.mxu0
    %v716 = vadd.f32 %v696, %v715
    %717 = vdwg.mxu0
    %718 = vmatpush.msra.mxu0 %v510
    %719 = vmatpush.msra.mxu0 %v509
    %720 = vmatpush.msra.mxu0 %v508
    %721 = vmatpush.msra.mxu0 %v507
    %722 = vmatpush.msra.mxu0 %v506
    %723 = vmatpush.msra.mxu0 %v505
    %724 = vmatpush.msra.mxu0 %v504
    %725 = vmatpush.msra.mxu0 %v503
    %726 = vmatpush.msra.mxu0 %v502
    %727 = vmatpush.msra.mxu0 %v501
    %728 = vmatpush.msra.mxu0 %v500
    %729 = vmatpush.msra.mxu0 %v499
    %730 = vmatpush.msra.mxu0 %v498
    %731 = vmatpush.msra.mxu0 %v497
    %732 = vmatpush.msra.mxu0 %v496
    %733 = vmatpush.msra.mxu0 %v495
    %734 = vmatmul.f32.gmra.mxu0 %v546
    %v735 = vpop.f32.mrf.mxu0
    %v736 = vadd.f32 %v716, %v735
    %737 = vdwg.mxu0
    %738 = vmatpush.msra.mxu0 %v526
    %739 = vmatpush.msra.mxu0 %v525
    %740 = vmatpush.msra.mxu0 %v524
    %741 = vmatpush.msra.mxu0 %v523
    %742 = vmatpush.msra.mxu0 %v522
    %743 = vmatpush.msra.mxu0 %v521
    %744 = vmatpush.msra.mxu0 %v520
    %745 = vmatpush.msra.mxu0 %v519
    %746 = vmatpush.msra.mxu0 %v518
    %747 = vmatpush.msra.mxu0 %v517
    %748 = vmatpush.msra.mxu0 %v516
    %749 = vmatpush.msra.mxu0 %v515
    %750 = vmatpush.msra.mxu0 %v514
    %751 = vmatpush.msra.mxu0 %v513
    %752 = vmatpush.msra.mxu0 %v512
    %753 = vmatpush.msra.mxu0 %v511
    %754 = vmatmul.f32.gmra.mxu0 %v547
    %v755 = vpop.f32.mrf.mxu0
    %v756 = vadd.f32 %v736, %v755
    %757 = vdwg.mxu0
    %vm758 = vcmask 1041408
    %v759 = vsel %vm758, %v756, -inf
    %v760 = vrot.slane %v759, 4
    %v761 = vmax.f32 %v759, %v760
    %v762 = vrot.slane %v761, 2
    %v763 = vmax.f32 %v761, %v762
    %v764 = vrot.slane %v763, 1
    %v765 = vmax.f32 %v763, %v764
    %v766 = vsub.f32 %v756, %v765
    %v767 = vmul.f32 %v766, 1.442695
    %v768 = vpow.pop %v767
    %v769 = vsel %vm758, %v768, 0.0
    %v770 = vrot.slane %v769, 4
    %v771 = vadd.f32 %v769, %v770
    %v772 = vrot.slane %v771, 2
    %v773 = vadd.f32 %v771, %v772
    %v774 = vrot.slane %v773, 1
    %v775 = vadd.f32 %v773, %v774
    %v776 = vrcp.pop %v775
    %v777 = vmul.f32 %v775, %v776
    %v778 = vsub.f32 1.0, %v777
    %v779 = vmul.f32 %v776, %v778
    %v780 = vadd.f32 %v776, %v779
    %vm781 = vweird.f32 %v775
    %vm782 = vweird.f32 %v776
    %vm783 = vmor %vm781, %vm782
    %v784 = vsel %vm783, %v776, %v780
    %v785 = vand.u32 2147483647, %v775
    %vm786 = vcmp.eq.f32.partialorder %v785, 8.507059e+37
    %v787 = vand.u32 %v775, 2147483648
    %v788 = vor.u32 1.1754944e-38, %v787
    %v789 = vsel %vm786, %v788, %v784
    %v790 = vmul.f32 %v768, %v789
    %791 = vst [vmem:[#allocation5] sm:$0x3] %v790
    // Predicated region
    $region30: #{image_classifier_forward.1} parent=1 // pred_check
      _
    $region31: #{image_classifier_forward.1} parent=1 // pred_check_branch
      %793 = sbr.rel (0) target = $region33
    $region32: #{image_classifier_forward.1} parent=1 // pred_region
      %795 = vsyncadd [#allocation6], 0
      %s797 = sshll.u32 [#allocation5], 4
      %s798 = int_to_ptr.vmem [resolvable:$true] %s797
      %s799 = sshll.u32 %s7, 4
      %s800 = int_to_ptr.hbm [resolvable:$true] %s799
      %802 = dma.vmem_to_hbm [thread:$0]  %s798, 32, %s800, [#allocation6]
    $region33: #{image_classifier_forward.1} parent=1 // pred_fallthru
      _
    // Predicated region
    $region34: #{image_classifier_forward.1} parent=1 // pred_check
      _
    $region35: #{image_classifier_forward.1} parent=1 // pred_check_branch
      %804 = sbr.rel (0) target = $region37
    $region36: #{image_classifier_forward.1} parent=1 // pred_region
      %806 = dma.done [#allocation6], 32
    $region37: #{image_classifier_forward.1} parent=1 // pred_fallthru
      _
    %807 = vsyncpa [#allocation6], 1

</llo_original>
